<compile_context>
chip_gen: v7x
topology: tpu7x:2x2x1
jax: 0.10.0
libtpu: 0.0.40
codegen_flags: <defaults>
</compile_context>

<pallas_src>
import functools

import jax
import jax.numpy as jnp
import numpy as np
from jax.experimental import pallas as pl
from jax.experimental.pallas import tpu as pltpu


def _pick_tile_n(n_rows, n_classes, itemsize):
    """Biggest batch tile that keeps inputs (double-buffered) + f32 temps in VMEM."""
    del itemsize  # budget is dominated by the f32 intermediates
    budget_elems = 768 * 1024            # ~ (2 input bufs + 4 f32 temps) * T*C*4B <= ~19 MiB
    t = budget_elems // max(int(n_classes), 1)
    t = max(8, min(int(t), 1024))
    t = (t // 8) * 8
    if t >= n_rows:
        return int(n_rows)
    return int(t)


def _focal_loss0_kernel(*refs, gamma, n_rows, tile_n, blocks_per_partial, use_alpha):
    # refs: x_ref (T, C), t_ref (T, 1) [, alpha_ref (1, C)], o_ref (8, 128)
    if use_alpha:
        x_ref, t_ref, alpha_ref, o_ref = refs
    else:
        x_ref, t_ref, o_ref = refs
        alpha_ref = None

    p_idx = pl.program_id(0)   # partial index ("parallel")
    j_idx = pl.program_id(1)   # reduction step ("arbitrary")

    @pl.when(j_idx == 0)
    def _():
        o_ref[...] = jnp.zeros_like(o_ref)

    x = x_ref[...].astype(jnp.float32)          # (T, C), cast in-kernel (bf16-friendly)
    t = t_ref[...]                              # (T, 1) int32
    T, C = x.shape

    # Numerically stable log-softmax pieces (no full P = e/denom materialization).
    m = jnp.max(x, axis=1, keepdims=True)       # (T, 1)
    e = jnp.exp(x - m)                          # (T, C)  -- single EUP pass over the tile
    denom = jnp.sum(e, axis=1, keepdims=True)   # (T, 1)

    # One-hot select of the target class via iota compare (no scatter).
    col = jax.lax.broadcasted_iota(jnp.int32, (T, C), 1)
    class_mask = (col == t).astype(jnp.float32)            # (T, C)
    x_t = jnp.sum(x * class_mask, axis=1, keepdims=True)   # (T, 1)

    log_p = (x_t - m) - jnp.log(denom)          # (T, 1)  log softmax[target]
    probs = jnp.exp(log_p)                      # (T, 1)

    one_minus = 1.0 - probs
    g = float(gamma)
    if g == 0.0:
        focal = jnp.ones_like(one_minus)
    elif g == 1.0:
        focal = one_minus
    elif g == 2.0:
        focal = one_minus * one_minus           # VPU square instead of exp/log pow
    elif g == float(int(g)) and 0 < int(g) <= 8:
        focal = one_minus
        for _ in range(int(g) - 1):
            focal = focal * one_minus
    else:
        focal = jnp.power(one_minus, g)

    loss = -(focal * log_p)                     # (T, 1)

    if use_alpha:
        alpha = alpha_ref[...].astype(jnp.float32)                  # (1, C)
        a = jnp.sum(class_mask * alpha, axis=1, keepdims=True)      # (T, 1)
        loss = a * loss

    # Mask rows that fall past the true batch (padded last block and clamped
    # duplicate blocks of the partial split). Uses the *logical* block index.
    block = p_idx * blocks_per_partial + j_idx
    row_ids = block * tile_n + jax.lax.broadcasted_iota(jnp.int32, (T, 1), 0)
    loss = jnp.where(row_ids < n_rows, loss, 0.0)

    tile_sum = jnp.sum(loss, axis=0, keepdims=True)   # (1, 1)
    o_ref[...] += tile_sum                            # broadcast into the (8,128) partial block


def focal_loss0(inputs, targets, alpha=None, *, gamma=2.0, size_average=True,
                tile_n=None, num_partials=2):
    """Pallas implementation of FocalLoss0.forward.

    inputs:  (N, C) float logits (f32 or bf16)
    targets: (N,)   int class ids in [0, C)
    alpha:   (C, 1) (or (C,)) per-class weights, or None (== torch.ones(C, 1))
    Returns a scalar float32 loss.
    """
    N, C = inputs.shape
    itemsize = jnp.dtype(inputs.dtype).itemsize

    if tile_n is None:
        tile_n = _pick_tile_n(N, C, itemsize)
    tile_n = int(tile_n)
    if tile_n >= N:
        tile_n = N                       # block == full dim (valid even if N % 8 != 0)
    else:
        tile_n = max(8, (tile_n // 8) * 8)

    nb = -(-N // tile_n)                 # total batch blocks
    P = max(1, int(num_partials))        # per-TensorCore partials (2 helps v7x)
    nbp = -(-nb // P)                    # blocks per partial

    t2d = targets.reshape(N, 1).astype(jnp.int32)

    # Specialize away the default all-ones alpha (skips an (N,C) mul + XLU reduce).
    use_alpha = alpha is not None
    if use_alpha:
        try:
            a_np = np.asarray(alpha)
            if a_np.size == C and np.all(a_np == 1.0):
                use_alpha = False
        except Exception:
            use_alpha = True             # traced alpha -> keep the general path

    def blk(p, j):
        # Clamp so the trailing (masked-out) iterations of a partial re-read a
        # valid block instead of going out of bounds.
        return (jnp.minimum(p * nbp + j, nb - 1), 0)

    in_specs = [
        pl.BlockSpec((tile_n, C), blk),          # logits, native dtype
        pl.BlockSpec((tile_n, 1), blk),          # targets
    ]
    args = [inputs, t2d]
    if use_alpha:
        in_specs.append(pl.BlockSpec((1, C), lambda p, j: (0, 0)))
        args.append(jnp.asarray(alpha, jnp.float32).reshape(1, C))

    kernel = functools.partial(
        _focal_loss0_kernel,
        gamma=float(gamma), n_rows=N, tile_n=tile_n,
        blocks_per_partial=nbp, use_alpha=use_alpha,
    )

    out = pl.pallas_call(
        kernel,
        out_shape=jax.ShapeDtypeStruct((8 * P, 128), jnp.float32),
        grid=(P, nbp),
        in_specs=in_specs,
        out_specs=pl.BlockSpec((8, 128), lambda p, j: (p, 0)),
        compiler_params=pltpu.CompilerParams(
            dimension_semantics=("parallel", "arbitrary"),
            vmem_limit_bytes=32 * 1024 * 1024,
        ),
    )(*args)

    partials = out[::8, 0]               # one scalar per partial block
    total = jnp.sum(partials)
    if size_average:
        total = total / jnp.float32(N)
    return total


def _reference_focal_loss0(inputs, targets, alpha, gamma=2.0, size_average=True):
    x = inputs.astype(jnp.float32)
    P = jax.nn.softmax(x, axis=1)
    N, C = x.shape
    mask = jax.nn.one_hot(targets, C, dtype=jnp.float32)
    probs = jnp.sum(P * mask, axis=1, keepdims=True)
    if alpha is None:
        a = jnp.ones((N, 1), jnp.float32)
    else:
        a = jnp.asarray(alpha, jnp.float32).reshape(-1)[targets].reshape(-1, 1)
    log_p = jnp.log(probs)
    batch_loss = -a * jnp.power(1.0 - probs, gamma) * log_p
    return jnp.mean(batch_loss) if size_average else jnp.sum(batch_loss)


if __name__ == "__main__":
    class_num = 4
    gamma = 2.0
    key = jax.random.PRNGKey(0)
    k1, k2, k3, k4 = jax.random.split(key, 4)

    # Test 1: module defaults (alpha = ones(C,1) -> specialized path), mean reduction.
    N1 = 8
    x1 = jax.random.normal(k1, (N1, class_num), dtype=jnp.float32)
    t1 = jax.random.randint(k2, (N1,), 0, class_num, dtype=jnp.int32)
    alpha1 = jnp.ones((class_num, 1), dtype=jnp.float32)   # FocalLoss0.__init__(alpha=None)
    loss1 = jax.block_until_ready(
        focal_loss0(x1, t1, alpha1, gamma=gamma, size_average=True))
    ref1 = _reference_focal_loss0(x1, t1, alpha1, gamma=gamma, size_average=True)
    np.testing.assert_allclose(np.asarray(loss1), np.asarray(ref1), rtol=1e-5, atol=1e-6)

    # Test 2: multi-block tiled path with a padded last block (N % tile != 0),
    # non-uniform alpha, sum reduction — exercises the grid/partial accumulation.
    N2 = 300
    x2 = jax.random.normal(k3, (N2, class_num), dtype=jnp.float32)
    t2 = jax.random.randint(k4, (N2,), 0, class_num, dtype=jnp.int32)
    alpha2 = jnp.asarray(np.linspace(0.5, 1.5, class_num), dtype=jnp.float32).reshape(class_num, 1)
    loss2 = jax.block_until_ready(
        focal_loss0(x2, t2, alpha2, gamma=gamma, size_average=False, tile_n=64))
    ref2 = _reference_focal_loss0(x2, t2, alpha2, gamma=gamma, size_average=False)
    np.testing.assert_allclose(np.asarray(loss2), np.asarray(ref2), rtol=3e-5, atol=1e-4)

    print("KERNEL_OK")
</pallas_src>

<mosaic_0001>
module attributes {stable_mosaic.version = 11 : i64} {
  func.func @_focal_loss0_kernel(%arg0: i32, %arg1: i32, %arg2: memref<8x4xf32, #tpu.memory_space<vmem>>, %arg3: memref<8x1xi32, #tpu.memory_space<vmem>>, %arg4: memref<8x128xf32, #tpu.memory_space<vmem>>) attributes {dimension_semantics = [#tpu.dimension_semantics<parallel>, #tpu.dimension_semantics<arbitrary>], iteration_bounds = array<i64: 2, 1>, scalar_prefetch = 0 : i64, scratch_operands = 0 : i64, tpu.core_type = #tpu.core_type<tc>, window_params = [{transform_indices = @transform_0, window_bounds = array<i64: 8, 4>}, {transform_indices = @transform_1, window_bounds = array<i64: 8, 1>}, {transform_indices = @transform_2, window_bounds = array<i64: 8, 128>}]} {
    %c0_i32 = arith.constant 0 : i32
    %0 = arith.cmpi eq, %arg1, %c0_i32 : i32
    %1 = arith.extui %0 : i1 to i32
    %c0_i32_0 = arith.constant 0 : i32
    %2 = arith.cmpi ne, %1, %c0_i32_0 : i32
    scf.if %2 {
      %cst_15 = arith.constant 0.000000e+00 : f32
      %46 = vector.broadcast %cst_15 : f32 to vector<8x128xf32>
      %c0_16 = arith.constant 0 : index
      %c0_17 = arith.constant 0 : index
      %47 = vector.load %arg4[%c0_16, %c0_17] : memref<8x128xf32, #tpu.memory_space<vmem>>, vector<8x128xf32>
      tpu.vector_store %arg4[%c0_16, %c0_17], %46 {strides = array<i32>} : memref<8x128xf32, #tpu.memory_space<vmem>>, vector<8x128xf32>,
    } else {
    }
    %c0 = arith.constant 0 : index
    %c0_1 = arith.constant 0 : index
    %3 = vector.load %arg2[%c0, %c0_1] : memref<8x4xf32, #tpu.memory_space<vmem>>, vector<8x4xf32>
    %c0_2 = arith.constant 0 : index
    %c0_3 = arith.constant 0 : index
    %4 = vector.load %arg3[%c0_2, %c0_3] : memref<8x1xi32, #tpu.memory_space<vmem>>, vector<8x1xi32>
    %cst = arith.constant dense<0xFF800000> : vector<8xf32>
    %5 = vector.multi_reduction <maximumf>, %3, %cst [1] : vector<8x4xf32> to vector<8xf32>
    %6 = vector.shape_cast %5 : vector<8xf32> to vector<8x1xf32>
    %7 = vector.broadcast %6 : vector<8x1xf32> to vector<8x4xf32>
    %8 = arith.subf %3, %7 : vector<8x4xf32>
    %9 = math.exp %8 : vector<8x4xf32>
    %cst_4 = arith.constant dense<0.000000e+00> : vector<8xf32>
    %10 = vector.multi_reduction <add>, %9, %cst_4 [1] : vector<8x4xf32> to vector<8xf32>
    %11 = vector.shape_cast %10 : vector<8xf32> to vector<8x1xf32>
    %12 = tpu.iota {dimensions = array<i32: 1>} : vector<8x4xi32>
    %13 = vector.broadcast %4 : vector<8x1xi32> to vector<8x4xi32>
    %14 = arith.cmpi eq, %12, %13 : vector<8x4xi32>
    %15 = arith.extui %14 : vector<8x4xi1> to vector<8x4xi32>
    %16 = arith.sitofp %15 : vector<8x4xi32> to vector<8x4xf32>
    %17 = arith.mulf %3, %16 : vector<8x4xf32>
    %cst_5 = arith.constant dense<0.000000e+00> : vector<8xf32>
    %18 = vector.multi_reduction <add>, %17, %cst_5 [1] : vector<8x4xf32> to vector<8xf32>
    %19 = vector.shape_cast %18 : vector<8xf32> to vector<8x1xf32>
    %20 = arith.subf %19, %6 : vector<8x1xf32>
    %21 = math.log %11 : vector<8x1xf32>
    %22 = arith.subf %20, %21 : vector<8x1xf32>
    %23 = math.exp %22 : vector<8x1xf32>
    %cst_6 = arith.constant 1.000000e+00 : f32
    %24 = vector.broadcast %cst_6 : f32 to vector<8x1xf32>
    %25 = arith.subf %24, %23 : vector<8x1xf32>
    %26 = arith.mulf %25, %25 : vector<8x1xf32>
    %27 = arith.mulf %26, %22 : vector<8x1xf32>
    %cst_7 = arith.constant 0.000000e+00 : f32
    %28 = vector.broadcast %cst_7 : f32 to vector<8x1xf32>
    %29 = arith.subf %28, %27 : vector<8x1xf32>
    %c1_i32 = arith.constant 1 : i32
    %30 = arith.muli %arg0, %c1_i32 : i32
    %31 = arith.addi %30, %arg1 : i32
    %c8_i32 = arith.constant 8 : i32
    %32 = arith.muli %31, %c8_i32 : i32
    %33 = tpu.iota {dimensions = array<i32: 0>} : vector<8x1xi32>
    %34 = vector.broadcast %32 : i32 to vector<8x1xi32>
    %35 = arith.addi %34, %33 : vector<8x1xi32>
    %c8_i32_8 = arith.constant 8 : i32
    %36 = vector.broadcast %c8_i32_8 : i32 to vector<8x1xi32>
    %37 = arith.cmpi slt, %35, %36 : vector<8x1xi32>
    %cst_9 = arith.constant 0.000000e+00 : f32
    %38 = vector.broadcast %cst_9 : f32 to vector<8x1xf32>
    %39 = arith.select %37, %29, %38 : vector<8x1xi1>, vector<8x1xf32>
    %cst_10 = arith.constant dense<0.000000e+00> : vector<1xf32>
    %40 = vector.multi_reduction <add>, %39, %cst_10 [0] : vector<8x1xf32> to vector<1xf32>
    %41 = vector.shape_cast %40 : vector<1xf32> to vector<1x1xf32>
    %c0_11 = arith.constant 0 : index
    %c0_12 = arith.constant 0 : index
    %42 = vector.load %arg4[%c0_11, %c0_12] : memref<8x128xf32, #tpu.memory_space<vmem>>, vector<8x128xf32>
    %43 = vector.broadcast %41 : vector<1x1xf32> to vector<8x128xf32>
    %44 = arith.addf %42, %43 : vector<8x128xf32>
    %c0_13 = arith.constant 0 : index
    %c0_14 = arith.constant 0 : index
    %45 = vector.load %arg4[%c0_13, %c0_14] : memref<8x128xf32, #tpu.memory_space<vmem>>, vector<8x128xf32>
    tpu.vector_store %arg4[%c0_13, %c0_14], %44 {strides = array<i32>} : memref<8x128xf32, #tpu.memory_space<vmem>>, vector<8x128xf32>,
    return
  }
  func.func @transform_0(%arg0: i32, %arg1: i32) -> (i32, i32) {
    %c1_i32 = arith.constant 1 : i32
    %0 = arith.muli %arg0, %c1_i32 : i32
    %1 = arith.addi %0, %arg1 : i32
    %c0_i32 = arith.constant 0 : i32
    %2 = arith.minsi %1, %c0_i32 : i32
    %c0_i32_0 = arith.constant 0 : i32
    %c0_i32_1 = arith.constant 0 : i32
    return %2, %c0_i32_0 : i32, i32
  }
  func.func @transform_1(%arg0: i32, %arg1: i32) -> (i32, i32) {
    %c1_i32 = arith.constant 1 : i32
    %0 = arith.muli %arg0, %c1_i32 : i32
    %1 = arith.addi %0, %arg1 : i32
    %c0_i32 = arith.constant 0 : i32
    %2 = arith.minsi %1, %c0_i32 : i32
    %c0_i32_0 = arith.constant 0 : i32
    %c0_i32_1 = arith.constant 0 : i32
    return %2, %c0_i32_0 : i32, i32
  }
  func.func @transform_2(%arg0: i32, %arg1: i32) -> (i32, i32) {
    %c0_i32 = arith.constant 0 : i32
    %c0_i32_0 = arith.constant 0 : i32
    return %arg0, %c0_i32 : i32, i32
  }
}

</mosaic_0001>

<llo_original>
// kernel: tpu_custom_call.1
$region0: #{tpu_custom_call.1}
  #allocation0 [shape = 'u32[]', space=smem, size = 0x4, offset = 0x4, fixed_abs, tag = 'smem constant byte address 0x4 - core index']
  #allocation1 [shape = 'u32[144,128]{1,0:T(1,128)}', space=vmem, size = 0x12000, scoped, tag = 'internal scratch']
  %s0 = inlined_call_operand.vmem [shape: f32[8,4], index: 0, kind: input, shape index: {}]
  %s1 = inlined_call_operand.vmem [shape: s32[8,1], index: 1, kind: input, shape index: {}]
  %s2 = inlined_call_operand.hbm [shape: f32[16,128], index: 2, kind: output, shape index: {}]
  %s3 = sld [smem:[#allocation0]]
  $region45: #{tpu_custom_call.1} parent=0
    _
  %s5 = ssub.s32 1, %s3
  %s6 = scalar_select 0, %s5, %s3
  $region1: #{tpu_custom_call.1} parent=0
    #allocation2 [shape = 'u8[8192]{0}', space=vmem, size = 0x2000, scoped, tag = 'output window, operand 0']
    #allocation3 [shape = 's32[2]{0}', space=sflag, size = 0x8, scoped, tag = 'scoped memory for tpu_custom_call.1']
    %7 = vsyncpa [#allocation3], 0
    %s8 = scalar_lea.sflag [#allocation3], 1
    %9 = vsyncpa %s8, 0
    loop: start=0, step=1, limit=4
    $region2: #{tpu_custom_call.1} parent=1 // loop_pre_header
      _
    $region3: #{tpu_custom_call.1} parent=1 // loop_header
      %s11 = sphi 0, %s15
      %p12 = scmp.ge.s32.totalorder %s11, 4
      %s18 = sphi 0, %s30
      %s19 = sphi 0, %s26
      %s20 = sphi 0, %s18
      %s21 = sphi 0, %s19
      %s22 = sphi 0, %s20
      %s23 = sphi 0, %s21
      %s39 = sphi 0, %s41
      %s42 = sphi 0, %s39
      %s43 = sphi 0, %s42
      %s59 = sphi 0, %s43
      %s71 = sphi 0, %s73
      %s74 = sphi 0, %s71
      %s75 = sphi 0, %s74
      %s91 = sphi 0, %s75
      %s97 = sphi 0, %s99
      %s100 = sphi 0, %s97
      %s101 = sphi 0, %s100
      %s117 = sphi 0, %s101
    $region4: #{tpu_custom_call.1} parent=1 // loop_header_branch
      %14 = sbr.rel (%p12) target = $region8
    $region5: #{tpu_custom_call.1} parent=1 // loop_body
      %s16 = ssub.s32 %s11, 1
      %s17 = ssub.s32 %s11, 2
      %s24 = sadd.s32 1, %s19
      %p25 = scmp.ge.s32.totalorder %s24, 1
      %s26 = scalar_select %p25, 0, %s24
      %s27 = sadd.s32 1, %s18
      %s28 = scalar_select %p25, %s27, %s18
      %p29 = scmp.ge.s32.totalorder %s28, 2
      %s30 = scalar_select %p29, 0, %s28
      %s31 = sadd.s32 %s18, %s19
      %p32 = scmp.lt.s32.totalorder %s31, 0
      %s33 = scalar_select %p32, %s31, 0
      %s34 = sadd.s32 %s30, %s26
      %p35 = scmp.lt.s32.totalorder %s34, 0
      %s36 = scalar_select %p35, %s34, 0
      %s37 = ssub.s32 %s33, %s36
      %p38 = scmp.eq.s32.totalorder %s37, 0
      %s40 = sadd.s32 %s39, 1
      %s41 = scalar_select %p38, %s39, %s40
      %p44 = pneg %p38
      %p45 = scmp.eq.s32.totalorder %s11, 1
      %p46 = por %p44, %p45
      %p47 = scmp.ne.s32.totalorder %s39, %s42
      %p48 = scmp.eq.s32.totalorder %s11, 0
      %p49 = por %p47, %p48
      %p50 = scmp.ne.s32.totalorder %s39, %s42
      %p51 = scmp.eq.s32.totalorder %s16, 1
      %p52 = por %p50, %p51
      %p53 = scmp.ne.s32.totalorder %s42, %s43
      %p54 = scmp.eq.s32.totalorder %s16, 0
      %p55 = por %p53, %p54
      %p56 = scmp.ne.s32.totalorder %s42, %s43
      %p57 = scmp.eq.s32.totalorder %s17, 1
      %p58 = por %p56, %p57
      %p60 = scmp.ne.s32.totalorder %s43, %s59
      %p61 = scmp.eq.s32.totalorder %s17, 0
      %p62 = por %p60, %p61
      %s63 = sadd.s32 %s18, %s19
      %p64 = scmp.lt.s32.totalorder %s63, 0
      %s65 = scalar_select %p64, %s63, 0
      %s66 = sadd.s32 %s30, %s26
      %p67 = scmp.lt.s32.totalorder %s66, 0
      %s68 = scalar_select %p67, %s66, 0
      %s69 = ssub.s32 %s65, %s68
      %p70 = scmp.eq.s32.totalorder %s69, 0
      %s72 = sadd.s32 %s71, 1
      %s73 = scalar_select %p70, %s71, %s72
      %p76 = pneg %p70
      %p77 = scmp.eq.s32.totalorder %s11, 1
      %p78 = por %p76, %p77
      %p79 = scmp.ne.s32.totalorder %s71, %s74
      %p80 = scmp.eq.s32.totalorder %s11, 0
      %p81 = por %p79, %p80
      %p82 = scmp.ne.s32.totalorder %s71, %s74
      %p83 = scmp.eq.s32.totalorder %s16, 1
      %p84 = por %p82, %p83
      %p85 = scmp.ne.s32.totalorder %s74, %s75
      %p86 = scmp.eq.s32.totalorder %s16, 0
      %p87 = por %p85, %p86
      %p88 = scmp.ne.s32.totalorder %s74, %s75
      %p89 = scmp.eq.s32.totalorder %s17, 1
      %p90 = por %p88, %p89
      %p92 = scmp.ne.s32.totalorder %s75, %s91
      %p93 = scmp.eq.s32.totalorder %s17, 0
      %p94 = por %p92, %p93
      %s95 = ssub.s32 %s18, %s30
      %p96 = scmp.eq.s32.totalorder %s95, 0
      %s98 = sadd.s32 %s97, 1
      %s99 = scalar_select %p96, %s97, %s98
      %p102 = pneg %p96
      %p103 = scmp.eq.s32.totalorder %s11, 1
      %p104 = por %p102, %p103
      %p105 = scmp.ne.s32.totalorder %s97, %s100
      %p106 = scmp.eq.s32.totalorder %s11, 0
      %p107 = por %p105, %p106
      %p108 = scmp.ne.s32.totalorder %s97, %s100
      %p109 = scmp.eq.s32.totalorder %s16, 1
      %p110 = por %p108, %p109
      %p111 = scmp.ne.s32.totalorder %s100, %s101
      %p112 = scmp.eq.s32.totalorder %s16, 0
      %p113 = por %p111, %p112
      %p114 = scmp.ne.s32.totalorder %s100, %s101
      %p115 = scmp.eq.s32.totalorder %s17, 1
      %p116 = por %p114, %p115
      %p118 = scmp.ne.s32.totalorder %s101, %s117
      %p119 = scmp.eq.s32.totalorder %s17, 0
      %p120 = por %p118, %p119
      %p121 = scmp.le.s32.totalorder 1, %s11
      %p122 = scmp.lt.s32.totalorder %s11, 3
      %p123 = pnand %p121, %p122
      %p124 = pneg %p123
      // Predicated region
      $region9: #{tpu_custom_call.1} parent=5 // pred_check
        _
      $region10: #{tpu_custom_call.1} parent=5 // pred_check_branch
        %126 = sbr.rel (%p123) target = $region12
      $region11: #{tpu_custom_call.1} parent=5 // pred_region
        %s127 = ssub.s32 %s11, 1
      $region12: #{tpu_custom_call.1} parent=5 // pred_fallthru
        _
      %p128 = scmp.lt.s32.totalorder %s11, 2
      // Predicated region
      $region13: #{tpu_custom_call.1} parent=5 // pred_check
        %p129 = pneg %p128
      $region14: #{tpu_custom_call.1} parent=5 // pred_check_branch
        %131 = sbr.rel (%p129) target = $region16
      $region15: #{tpu_custom_call.1} parent=5 // pred_region
        // Predicated region
        $region17: #{tpu_custom_call.1} parent=15 // pred_check
          %p132 = pneg %p49
        $region18: #{tpu_custom_call.1} parent=15 // pred_check_branch
          %134 = sbr.rel (%p132) target = $region20
        $region19: #{tpu_custom_call.1} parent=15 // pred_region
          %s135 = sadd.s32 %s18, %s19
          %p136 = scmp.lt.s32.totalorder %s135, 0
          %s137 = scalar_select %p136, %s135, 0
          %p138 = scmp.lt.s32.totalorder %s137, 0
          %s139 = scalar_select %p138, %s137, 0
          %s140 = smul.addr %s139, 8
          %s141 = scalar_lea.vmem %s0, %s140
          %s142 = sadd.s32 %s18, %s19
          %p143 = scmp.lt.s32.totalorder %s142, 0
          %s144 = scalar_select %p143, %s142, 0
        $region20: #{tpu_custom_call.1} parent=15 // pred_fallthru
          _
        // Predicated region
        $region21: #{tpu_custom_call.1} parent=15 // pred_check
          %p145 = pneg %p81
        $region22: #{tpu_custom_call.1} parent=15 // pred_check_branch
          %147 = sbr.rel (%p145) target = $region24
        $region23: #{tpu_custom_call.1} parent=15 // pred_region
          %s148 = sadd.s32 %s18, %s19
          %p149 = scmp.lt.s32.totalorder %s148, 0
          %s150 = scalar_select %p149, %s148, 0
          %p151 = scmp.lt.s32.totalorder %s150, 0
          %s152 = scalar_select %p151, %s150, 0
          %s153 = smul.addr %s152, 8
          %s154 = scalar_lea.vmem %s1, %s153
          %s155 = sadd.s32 %s18, %s19
          %p156 = scmp.lt.s32.totalorder %s155, 0
          %s157 = scalar_select %p156, %s155, 0
        $region24: #{tpu_custom_call.1} parent=15 // pred_fallthru
          _
      $region16: #{tpu_custom_call.1} parent=5 // pred_fallthru
        _
      %p158 = scmp.le.s32.totalorder 1, %s11
      %p159 = scmp.lt.s32.totalorder %s11, 3
      %p160 = pnand %p158, %p159
      %p161 = pneg %p160
      // Predicated region
      $region25: #{tpu_custom_call.1} parent=5 // pred_check
        _
      $region26: #{tpu_custom_call.1} parent=5 // pred_check_branch
        %163 = sbr.rel (%p160) target = $region28
      $region27: #{tpu_custom_call.1} parent=5 // pred_region
        %s164 = ssub.s32 %s11, 1
        %s165 = sadd.s32 %s20, %s21
        %p166 = scmp.lt.s32.totalorder %s165, 0
        %s167 = scalar_select %p166, %s165, 0
        %p168 = scmp.lt.s32.totalorder %s167, 0
        %s169 = scalar_select %p168, %s167, 0
        %s170 = smul.addr %s169, 8
        %s171 = scalar_lea.vmem %s0, %s170
        %p172 = pneg %p55
        %p173 = pneg %p52
        %s174 = sadd.s32 %s20, %s21
        %p175 = scmp.lt.s32.totalorder %s174, 0
        %s176 = scalar_select %p175, %s174, 0
        %p177 = scmp.lt.s32.totalorder %s176, 0
        %s178 = scalar_select %p177, %s176, 0
        %s179 = smul.addr %s178, 8
        %s180 = scalar_lea.vmem %s1, %s179
        %p181 = pneg %p87
        %p182 = pneg %p84
        %p183 = pneg %p113
        %p184 = pneg %p110
        %s185 = sand.u32 %s100, 1
        %s186 = scalar_lea.sflag [#allocation3], %s185
        %s187 = sand.u32 %s100, 1
        %s188 = smul.addr %s187, 8
        %s189 = scalar_lea.vmem [#allocation2], %s188
        %s190 = sadd.s32 %s20, %s21
        %p191 = scmp.lt.s32.totalorder %s190, 0
        %s192 = scalar_select %p191, %s190, 0
        %p193 = scmp.lt.s32.totalorder %s192, 0
        %s194 = scalar_select %p193, %s192, 0
        %s195 = smul.addr %s194, 8
        %s196 = scalar_lea.vmem %s0, %s195
        %s197 = sadd.s32 %s20, %s21
        %p198 = scmp.lt.s32.totalorder %s197, 0
        %s199 = scalar_select %p198, %s197, 0
        %s200 = sadd.s32 %s20, %s21
        %p201 = scmp.lt.s32.totalorder %s200, 0
        %s202 = scalar_select %p201, %s200, 0
        %p203 = scmp.lt.s32.totalorder %s202, 0
        %s204 = scalar_select %p203, %s202, 0
        %s205 = smul.addr %s204, 8
        %s206 = scalar_lea.vmem %s1, %s205
        %s207 = sadd.s32 %s20, %s21
        %p208 = scmp.lt.s32.totalorder %s207, 0
        %s209 = scalar_select %p208, %s207, 0
        %p210 = scmp.eq.s32.totalorder %s21, 0
        // Predicated region
        $region29: #{tpu_custom_call.1} parent=27 // pred_check
          %p211 = pneg %p210
        $region30: #{tpu_custom_call.1} parent=27 // pred_check_branch
          %213 = sbr.rel (%p211) target = $region32
        $region31: #{tpu_custom_call.1} parent=27 // pred_region
          %214 = vst [vmem:[%s189] sm:$0xff] 0.0
        $region32: #{tpu_custom_call.1} parent=27 // pred_fallthru
          _
        %v215 = vld [vmem:[%s196] sm:$0xff]
        %v216 = vld [vmem:[%s206] sm:$0xff]
        %vm217 = vcmask 31744
        %v218 = vsel %vm217, %v215, -inf
        %219 = vmax.xlane.f32.xlu0 %v218
        %v220 = vpop.xlane.xlu0 %219
        %v221 = vsub.f32 %v215, %v220
        %v222 = vmul.f32 %v221, 1.442695
        %v223 = vpow.pop %v222
        %v224 = vsel %vm217, %v223, 0.0
        %225 = vadd.xlane.f32.xlu0 %v224
        %v226 = vpop.xlane.xlu0 %225
        %v227 = vlaneseq
        %v228 = vand.u32 %v227, 127
        %229 = vset.pattern.permute.xlu0 0
        %230 = vperm.xlu0 %229, %v216
        %v231 = vpop.permute.xlu0 %230
        %vm232 = vcmp.eq.s32.totalorder %v228, %v231
        %v233 = vsel %vm232, 1, 0
        %v234 = vcvt.s32.f32 %v233
        %v235 = vmul.f32 %v215, %v234
        %v236 = vsel %vm217, %v235, 0.0
        %237 = vadd.xlane.f32.xlu0 %v236
        %v238 = vpop.xlane.xlu0 %237
        %v239 = vsub.f32 %v238, %v220
        %v240 = vlog2.pop %v226
        %v241 = vmul.f32 %v240, 0.6931472
        %v242 = vsub.f32 %v239, %v241
        %v243 = vmul.f32 %v242, 1.442695
        %v244 = vpow.pop %v243
        %v245 = vsub.f32 1.0, %v244
        %v246 = vmul.f32 %v245, %v245
        %v247 = vmul.f32 %v246, %v242
        %v248 = vsub.f32 0.0, %v247
        %s249 = sadd.s32 %s20, %s21
        %s250 = smul.u32 %s249, 8
        %v251 = vlaneseq
        %v252 = vshrl.u32 %v251, 7
        %v253 = vstv %s250
        %v254 = vadd.s32 %v253, %v252
        %vm255 = vcmp.lt.s32.totalorder %v254, 8
        %v256 = vsel %vm255, %v248, 0.0
        %v257 = vrot.slane %v256, 4
        %v258 = vadd.f32 %v256, %v257
        %v259 = vrot.slane %v258, 2
        %v260 = vadd.f32 %v258, %v259
        %v261 = vrot.slane %v260, 1
        %v262 = vadd.f32 %v260, %v261
        %v263 = vld [vmem:[%s189] sm:$0xff]
        %v264 = vadd.f32 %v263, %v262
        %265 = vst [vmem:[%s189] sm:$0xff] %v264
        %s266 = sand.u32 %s100, 1
        %s267 = scalar_lea.sflag [#allocation3], %s266
        %s268 = sand.u32 %s100, 1
        %s269 = smul.addr %s268, 8
        %s270 = scalar_lea.vmem [#allocation2], %s269
        // Predicated region
        $region33: #{tpu_custom_call.1} parent=27 // pred_check
          %p271 = pneg %p110
        $region34: #{tpu_custom_call.1} parent=27 // pred_check_branch
          %273 = sbr.rel (%p271) target = $region36
        $region35: #{tpu_custom_call.1} parent=27 // pred_region
          %s275 = ssub.s32 128, 128
          %276 = vsyncadd %s267, %s275
          %s277 = smul.addr %s20, 128
          %s278 = scalar_lea.hbm %s2, %s277
          %s280 = sshll.u32 %s270, 4
          %s281 = int_to_ptr.vmem [resolvable:$true] %s280
          %283 = dma.vmem_to_hbm [thread:$0]  %s281, 128, %s278, %s267
        $region36: #{tpu_custom_call.1} parent=27 // pred_fallthru
          _
      $region28: #{tpu_custom_call.1} parent=5 // pred_fallthru
        _
      %p284 = scmp.le.s32.totalorder 2, %s11
      // Predicated region
      $region37: #{tpu_custom_call.1} parent=5 // pred_check
        %p285 = pneg %p284
      $region38: #{tpu_custom_call.1} parent=5 // pred_check_branch
        %287 = sbr.rel (%p285) target = $region40
      $region39: #{tpu_custom_call.1} parent=5 // pred_region
        %s288 = ssub.s32 %s11, 2
        // Predicated region
        $region41: #{tpu_custom_call.1} parent=39 // pred_check
          %p289 = pneg %p116
        $region42: #{tpu_custom_call.1} parent=39 // pred_check_branch
          %291 = sbr.rel (%p289) target = $region44
        $region43: #{tpu_custom_call.1} parent=39 // pred_region
          %s292 = sand.u32 %s101, 1
          %s293 = scalar_lea.sflag [#allocation3], %s292
          %s294 = sand.u32 %s101, 1
          %s295 = smul.addr %s294, 8
          %s296 = scalar_lea.vmem [#allocation2], %s295
          %297 = dma.done %s293, 128
        $region44: #{tpu_custom_call.1} parent=39 // pred_fallthru
          _
      $region40: #{tpu_custom_call.1} parent=5 // pred_fallthru
        _
    $region6: #{tpu_custom_call.1} parent=1 // loop_footer
      %s15 = sadd.s32 1, %s11
    $region7: #{tpu_custom_call.1} parent=1 // loop_footer_branch
      %10 = sbr.rel target = $region3
    $region8: #{tpu_custom_call.1} parent=1 // loop_exit
      _
    %298 = vsyncpa [#allocation3], 1
    %s299 = scalar_lea.sflag [#allocation3], 1
    %300 = vsyncpa %s299, 1

</llo_original>
